<compile_context>
chip_gen: v7x
topology: tpu7x:2x2x1
jax: 0.10.0
libtpu: 0.0.40
codegen_flags: <defaults>
</compile_context>

<pallas_src>
import functools

import jax
import jax.numpy as jnp
from jax import lax
from jax.experimental import pallas as pl
from jax.experimental.pallas import tpu as pltpu

LSPACE = 1024
H1 = 48
H2 = 20
OUT = 1

# Lane-padded hidden widths used inside the kernel (zero-padded, mathematically inert).
# Keep at 128 (fills v5e's 128-wide MXU; kernel is HBM-bound on v6e/v7x anyway).
H1P = 128
H2P = 128

# Contract the last dim of both operands (A @ B^T), as in flash-attention's q @ k^T.
_NT_DIMS = (((1,), (1,)), ((), ()))


def _disc_kernel(x_ref, w1_ref, b1_ref, w2_ref, b2_ref, w3_ref, b3_ref, o_ref,
                 *, approx_sigmoid):
    # x_ref: (tb, LSPACE) streamed batch tile (f32 or bf16); weights are resident.
    x = x_ref[...]

    # Linear(LSPACE, 48) + ReLU  (MXU, f32 accumulation; 128 padded output lanes)
    h1 = jnp.dot(x, w1_ref[...], preferred_element_type=jnp.float32) + b1_ref[...]
    h1 = jnp.maximum(h1, 0.0)

    # Linear(48, 20) + ReLU  (padded 128x128)
    h2 = jnp.dot(h1, w2_ref[...], preferred_element_type=jnp.float32) + b2_ref[...]
    h2 = jnp.maximum(h2, 0.0)

    # Linear(20, 1) + Sigmoid, computed transposed so the result is lane-dense:
    #   logits^T (1, tb) = w3_row (1, 128) @ h2^T (128, tb)
    logits_t = lax.dot_general(
        w3_ref[...], h2, _NT_DIMS, preferred_element_type=jnp.float32
    ) + b3_ref[0, 0]                      # b3 is an SMEM scalar

    denom = 1.0 + jnp.exp(-logits_t)      # exp on the EUP
    if approx_sigmoid:
        sig = pl.reciprocal(denom, approx=True)   # reciprocal also on the EUP (free slot)
    else:
        sig = 1.0 / denom                          # exact f32 path
    o_ref[...] = sig.astype(o_ref.dtype)


def _forward_tiles(x, pp, tb, n_out, *, approx_sigmoid, vmem_limit_bytes):
    """Fused MLP over the first `n_out` rows of x (n_out % tb == 0).

    Returns a lane-dense (1, n_out) float32 array of sigmoid scores.
    `x` may have more than n_out rows; only in-bounds blocks are indexed.
    """
    grid = (n_out // tb,)
    resident = lambda shape: pl.BlockSpec(shape, lambda i: (0, 0))

    xbytes = jnp.dtype(x.dtype).itemsize
    weight_bytes = sum(int(v.size) * jnp.dtype(v.dtype).itemsize for v in pp.values())
    cost = pl.CostEstimate(
        flops=2 * n_out * (LSPACE * H1P + H1P * H2P + H2P),
        transcendentals=n_out,
        bytes_accessed=n_out * LSPACE * int(xbytes) + int(weight_bytes) + n_out * 4,
    )

    compiler_kwargs = dict(dimension_semantics=("parallel",))
    if vmem_limit_bytes is not None:
        compiler_kwargs["vmem_limit_bytes"] = int(vmem_limit_bytes)

    return pl.pallas_call(
        functools.partial(_disc_kernel, approx_sigmoid=approx_sigmoid),
        out_shape=jax.ShapeDtypeStruct((1, n_out), jnp.float32),
        grid_spec=pltpu.PrefetchScalarGridSpec(
            num_scalar_prefetch=0,
            grid=grid,
            in_specs=[
                pl.BlockSpec((tb, LSPACE), lambda i: (i, 0)),   # streamed x batch tile
                resident((LSPACE, H1P)),                        # w1
                resident((1, H1P)),                             # b1
                resident((H1P, H2P)),                           # w2
                resident((1, H2P)),                             # b2
                resident((1, H2P)),                             # w3 (row vector)
                pl.BlockSpec(memory_space=pltpu.MemorySpace.SMEM),  # b3 scalar
            ],
            out_specs=pl.BlockSpec((1, tb), lambda i: (0, i)),  # lane-dense output
        ),
        compiler_params=pltpu.CompilerParams(**compiler_kwargs),
        cost_estimate=cost,
    )(x, pp["w1"], pp["b1"], pp["w2"], pp["b2"], pp["w3"], pp["b3"])


def discriminator_forward(x, prepared_params, *, batch_tile=None,
                          approx_sigmoid=True, vmem_limit_bytes=None):
    """x: (B, LSPACE).  prepared_params: output of prepare_params().

    Returns sigmoid scores of shape (B, 1), matching the PyTorch Discriminator.
    """
    B, F = x.shape
    assert F == LSPACE, f"expected {LSPACE} input features, got {F}"
    pp = prepared_params

    stream_dtype = pp["w1"].dtype
    if x.dtype != stream_dtype:
        # Fallback only: ideally the producer already emits x in the streaming dtype
        # (bf16 by default) so this extra HBM round-trip of x never happens.
        x = x.astype(stream_dtype)

    # ---- batch tile selection -------------------------------------------------
    if batch_tile is not None:
        tb = int(batch_tile)
        if tb != B and tb % 128 != 0:
            raise ValueError(
                "batch_tile must equal the batch size or be a multiple of 128")
        tb = min(tb, B)
    elif B <= 256:
        tb = B                                   # single full-dims block
    else:
        # >= ~4 grid steps for mid-size batches; cap so 2x x-tile + weights fits
        # v5e's 16 MiB default scoped VMEM (1024 rows f32 ~ 9 MiB, 2048 rows bf16 ~ 9 MiB).
        cap = 2048 if jnp.dtype(stream_dtype).itemsize <= 2 else 1024
        tb = min(cap, max(128, (B // 4) // 128 * 128))

    n_main = (B // tb) * tb
    rem = B - n_main

    parts = []
    if n_main > 0:
        parts.append(_forward_tiles(x, pp, tb, n_main,
                                    approx_sigmoid=approx_sigmoid,
                                    vmem_limit_bytes=vmem_limit_bytes))
    if rem > 0:
        # Copy only the remainder rows (< 1 tile) and run them as one full-dims block.
        x_rem = lax.slice_in_dim(x, n_main, B, axis=0)
        parts.append(_forward_tiles(x_rem, pp, rem, rem,
                                    approx_sigmoid=approx_sigmoid,
                                    vmem_limit_bytes=vmem_limit_bytes))

    out_t = parts[0] if len(parts) == 1 else jnp.concatenate(parts, axis=1)
    # (1, B) lane-major -> (B, 1) to match nn.Sequential's output shape.
    return out_t.reshape(B, 1)


def prepare_params(params, *, compute_dtype=jnp.bfloat16):
    """One-time layout prep: pad hidden dims to 128 lanes and cast the HBM-heavy
    streamed operand (w1) to `compute_dtype`.  Accumulation / activations stay f32."""
    w1 = jnp.pad(params["w1"], ((0, 0), (0, H1P - H1))).astype(compute_dtype)      # (1024,128)
    b1 = jnp.pad(params["b1"].reshape(1, H1), ((0, 0), (0, H1P - H1))).astype(jnp.float32)
    w2 = jnp.pad(params["w2"], ((0, H1P - H1), (0, H2P - H2))).astype(jnp.float32)  # (128,128)
    b2 = jnp.pad(params["b2"].reshape(1, H2), ((0, 0), (0, H2P - H2))).astype(jnp.float32)
    w3 = jnp.pad(params["w3"].reshape(1, H2), ((0, 0), (0, H2P - H2))).astype(jnp.float32)
    b3 = params["b3"].reshape(1, OUT).astype(jnp.float32)                           # (1,1) SMEM
    return {"w1": w1, "b1": b1, "w2": w2, "b2": b2, "w3": w3, "b3": b3}


def init_params(key):
    """Deterministic init mimicking nn.Linear's uniform(-1/sqrt(fan_in), 1/sqrt(fan_in))."""
    ks = jax.random.split(key, 6)

    def lin(kw, kb, fan_in, fan_out):
        bound = 1.0 / jnp.sqrt(fan_in)
        w = jax.random.uniform(kw, (fan_in, fan_out), jnp.float32, -bound, bound)
        b = jax.random.uniform(kb, (fan_out,), jnp.float32, -bound, bound)
        return w, b

    w1, b1 = lin(ks[0], ks[1], LSPACE, H1)
    w2, b2 = lin(ks[2], ks[3], H1, H2)
    w3, b3 = lin(ks[4], ks[5], H2, OUT)
    return {"w1": w1, "b1": b1, "w2": w2, "b2": b2, "w3": w3, "b3": b3}


if __name__ == "__main__":
    key = jax.random.PRNGKey(0)
    kx1, kx2, kx3, kp = jax.random.split(key, 4)
    raw = init_params(kp)

    def reference(xv, p):
        h1 = jnp.maximum(xv @ p["w1"] + p["b1"], 0.0)
        h2 = jnp.maximum(h1 @ p["w2"] + p["b2"], 0.0)
        return jax.nn.sigmoid(h2 @ p["w3"] + p["b3"])

    params_f32 = prepare_params(raw, compute_dtype=jnp.float32)   # exact escape hatch
    params_bf16 = prepare_params(raw)                              # bf16 streaming default

    # 1) Small batch, single full-dims block, exact sigmoid: tight check.
    x_small = jax.random.normal(kx1, (8, LSPACE), dtype=jnp.float32)
    out_small = jax.block_until_ready(
        discriminator_forward(x_small, params_f32, approx_sigmoid=False))
    assert out_small.shape == (8, 1)
    assert jnp.allclose(out_small, reference(x_small, raw), atol=1e-5, rtol=1e-5), \
        "exact f32 single-tile mismatch vs reference"

    # 2) Default bf16 streaming (cast at the producer), pipelined grid of 2 tiles.
    x_mid = jax.random.normal(kx2, (256, LSPACE), dtype=jnp.float32).astype(jnp.bfloat16)
    out_mid = jax.block_until_ready(
        discriminator_forward(x_mid, params_bf16, batch_tile=128))
    assert out_mid.shape == (256, 1)
    assert jnp.allclose(out_mid, reference(x_mid.astype(jnp.float32), raw), atol=5e-2), \
        "bf16 tiled mismatch vs reference"

    # 3) Ragged batch: 200 = 128 (tiled prefix on full x, no pad copy) + 72 (remainder call).
    x_rag = jax.random.normal(kx3, (200, LSPACE), dtype=jnp.float32)
    out_rag = jax.block_until_ready(
        discriminator_forward(x_rag, params_f32, batch_tile=128))
    assert out_rag.shape == (200, 1)
    assert jnp.allclose(out_rag, reference(x_rag, raw), atol=2e-2), \
        "ragged-batch mismatch vs reference"

    print("KERNEL_OK")
</pallas_src>

<mosaic_0001>
module attributes {stable_mosaic.version = 11 : i64} {
  func.func @_disc_kernel(%arg0: i32, %arg1: memref<8x1024xf32, #tpu.memory_space<vmem>>, %arg2: memref<1024x128xf32, #tpu.memory_space<vmem>>, %arg3: memref<1x128xf32, #tpu.memory_space<vmem>>, %arg4: memref<128x128xf32, #tpu.memory_space<vmem>>, %arg5: memref<1x128xf32, #tpu.memory_space<vmem>>, %arg6: memref<1x128xf32, #tpu.memory_space<vmem>>, %arg7: memref<1x1xf32, #tpu.memory_space<smem>>, %arg8: memref<1x8xf32, #tpu.memory_space<vmem>>) attributes {dimension_semantics = [#tpu.dimension_semantics<parallel>], iteration_bounds = array<i64: 1>, scalar_prefetch = 0 : i64, scratch_operands = 0 : i64, tpu.core_type = #tpu.core_type<tc>, window_params = [{transform_indices = @transform_0, window_bounds = array<i64: 8, 1024>}, {pipeline_mode = #tpu.pipeline_mode<synchronous>, transform_indices = @transform_1, window_bounds = array<i64: 1024, 128>}, {pipeline_mode = #tpu.pipeline_mode<synchronous>, transform_indices = @transform_2, window_bounds = array<i64: 1, 128>}, {pipeline_mode = #tpu.pipeline_mode<synchronous>, transform_indices = @transform_3, window_bounds = array<i64: 128, 128>}, {pipeline_mode = #tpu.pipeline_mode<synchronous>, transform_indices = @transform_4, window_bounds = array<i64: 1, 128>}, {pipeline_mode = #tpu.pipeline_mode<synchronous>, transform_indices = @transform_5, window_bounds = array<i64: 1, 128>}, {transform_indices = @transform_6, window_bounds = array<i64: 1, 1>}, {transform_indices = @transform_7, window_bounds = array<i64: 1, 8>}]} {
    %c0 = arith.constant 0 : index
    %c0_0 = arith.constant 0 : index
    %0 = vector.load %arg1[%c0, %c0_0] : memref<8x1024xf32, #tpu.memory_space<vmem>>, vector<8x1024xf32>
    %c0_1 = arith.constant 0 : index
    %c0_2 = arith.constant 0 : index
    %1 = vector.load %arg2[%c0_1, %c0_2] : memref<1024x128xf32, #tpu.memory_space<vmem>>, vector<1024x128xf32>
    %cst = arith.constant dense<0.000000e+00> : vector<8x128xf32>
    %2 = tpu.matmul %0, %1, %cst {dimension_numbers = #tpu.dot_dimension_numbers<[1], [0], [0], [1], [0, 0, 1, 1], [], []>} : vector<8x1024xf32>, vector<1024x128xf32>, vector<8x128xf32> -> vector<8x128xf32>
    %c0_3 = arith.constant 0 : index
    %c0_4 = arith.constant 0 : index
    %3 = vector.load %arg3[%c0_3, %c0_4] : memref<1x128xf32, #tpu.memory_space<vmem>>, vector<1x128xf32>
    %4 = vector.broadcast %3 : vector<1x128xf32> to vector<8x128xf32>
    %5 = arith.addf %2, %4 : vector<8x128xf32>
    %cst_5 = arith.constant 0.000000e+00 : f32
    %6 = vector.broadcast %cst_5 : f32 to vector<8x128xf32>
    %7 = arith.maximumf %5, %6 : vector<8x128xf32>
    %c0_6 = arith.constant 0 : index
    %c0_7 = arith.constant 0 : index
    %8 = vector.load %arg4[%c0_6, %c0_7] : memref<128x128xf32, #tpu.memory_space<vmem>>, vector<128x128xf32>
    %cst_8 = arith.constant dense<0.000000e+00> : vector<8x128xf32>
    %9 = tpu.matmul %7, %8, %cst_8 {dimension_numbers = #tpu.dot_dimension_numbers<[1], [0], [0], [1], [0, 0, 1, 1], [], []>} : vector<8x128xf32>, vector<128x128xf32>, vector<8x128xf32> -> vector<8x128xf32>
    %c0_9 = arith.constant 0 : index
    %c0_10 = arith.constant 0 : index
    %10 = vector.load %arg5[%c0_9, %c0_10] : memref<1x128xf32, #tpu.memory_space<vmem>>, vector<1x128xf32>
    %11 = vector.broadcast %10 : vector<1x128xf32> to vector<8x128xf32>
    %12 = arith.addf %9, %11 : vector<8x128xf32>
    %cst_11 = arith.constant 0.000000e+00 : f32
    %13 = vector.broadcast %cst_11 : f32 to vector<8x128xf32>
    %14 = arith.maximumf %12, %13 : vector<8x128xf32>
    %c0_12 = arith.constant 0 : index
    %c0_13 = arith.constant 0 : index
    %15 = vector.load %arg6[%c0_12, %c0_13] : memref<1x128xf32, #tpu.memory_space<vmem>>, vector<1x128xf32>
    %cst_14 = arith.constant dense<0.000000e+00> : vector<1x8xf32>
    %16 = tpu.matmul %15, %14, %cst_14 {dimension_numbers = #tpu.dot_dimension_numbers<[1], [1], [0], [0], [0, 0, 1, 0], [], []>} : vector<1x128xf32>, vector<8x128xf32>, vector<1x8xf32> -> vector<1x8xf32>
    %c0_15 = arith.constant 0 : index
    %c0_16 = arith.constant 0 : index
    %17 = memref.load %arg7[%c0_15, %c0_16] : memref<1x1xf32, #tpu.memory_space<smem>>
    %18 = vector.broadcast %17 : f32 to vector<1x8xf32>
    %19 = arith.addf %16, %18 : vector<1x8xf32>
    %cst_17 = arith.constant 0.000000e+00 : f32
    %20 = vector.broadcast %cst_17 : f32 to vector<1x8xf32>
    %21 = arith.subf %20, %19 : vector<1x8xf32>
    %22 = math.exp %21 : vector<1x8xf32>
    %cst_18 = arith.constant 1.000000e+00 : f32
    %23 = vector.broadcast %cst_18 : f32 to vector<1x8xf32>
    %24 = arith.addf %23, %22 : vector<1x8xf32>
    %cst_19 = arith.constant 1.000000e+00 : f32
    %25 = vector.broadcast %cst_19 : f32 to vector<1x8xf32>
    %26 = arith.divf %25, %24 : vector<1x8xf32>
    %c0_20 = arith.constant 0 : index
    %c0_21 = arith.constant 0 : index
    %27 = vector.load %arg8[%c0_20, %c0_21] : memref<1x8xf32, #tpu.memory_space<vmem>>, vector<1x8xf32>
    tpu.vector_store %arg8[%c0_20, %c0_21], %26 {strides = array<i32>} : memref<1x8xf32, #tpu.memory_space<vmem>>, vector<1x8xf32>,
    return
  }
  func.func @transform_0(%arg0: i32) -> (i32, i32) {
    %c0_i32 = arith.constant 0 : i32
    %c0_i32_0 = arith.constant 0 : i32
    return %arg0, %c0_i32 : i32, i32
  }
  func.func @transform_1(%arg0: i32) -> (i32, i32) {
    %c0_i32 = arith.constant 0 : i32
    %c0_i32_0 = arith.constant 0 : i32
    %c0_i32_1 = arith.constant 0 : i32
    return %c0_i32, %c0_i32_0 : i32, i32
  }
  func.func @transform_2(%arg0: i32) -> (i32, i32) {
    %c0_i32 = arith.constant 0 : i32
    %c0_i32_0 = arith.constant 0 : i32
    %c0_i32_1 = arith.constant 0 : i32
    return %c0_i32, %c0_i32_0 : i32, i32
  }
  func.func @transform_3(%arg0: i32) -> (i32, i32) {
    %c0_i32 = arith.constant 0 : i32
    %c0_i32_0 = arith.constant 0 : i32
    %c0_i32_1 = arith.constant 0 : i32
    return %c0_i32, %c0_i32_0 : i32, i32
  }
  func.func @transform_4(%arg0: i32) -> (i32, i32) {
    %c0_i32 = arith.constant 0 : i32
    %c0_i32_0 = arith.constant 0 : i32
    %c0_i32_1 = arith.constant 0 : i32
    return %c0_i32, %c0_i32_0 : i32, i32
  }
  func.func @transform_5(%arg0: i32) -> (i32, i32) {
    %c0_i32 = arith.constant 0 : i32
    %c0_i32_0 = arith.constant 0 : i32
    %c0_i32_1 = arith.constant 0 : i32
    return %c0_i32, %c0_i32_0 : i32, i32
  }
  func.func @transform_6(%arg0: i32) -> (i32, i32) {
    %c0_i32 = arith.constant 0 : i32
    %c0_i32_0 = arith.constant 0 : i32
    %c0_i32_1 = arith.constant 0 : i32
    return %c0_i32, %c0_i32_0 : i32, i32
  }
  func.func @transform_7(%arg0: i32) -> (i32, i32) {
    %c0_i32 = arith.constant 0 : i32
    %c0_i32_0 = arith.constant 0 : i32
    return %c0_i32, %arg0 : i32, i32
  }
}

</mosaic_0001>

<llo_original>
// kernel: tpu_custom_call.1
$region0: #{tpu_custom_call.1}
  #allocation0 [shape = 'u32[]', space=smem, size = 0x4, offset = 0x4, fixed_abs, tag = 'smem constant byte address 0x4 - core index']
  #allocation1 [shape = 'u32[144,128]{1,0:T(1,128)}', space=vmem, size = 0x12000, scoped, tag = 'internal scratch']
  #allocation2 [shape = 'f32[1,1]{1,0:T(1,128)S(6)}', space=smem, size = 0x200, scoped, tag = 'scoped memory for tpu_custom_call.1']
  %s0 = inlined_call_operand.hbm [shape: f32[8,1024], index: 0, kind: input, shape index: {}]
  %s1 = inlined_call_operand.hbm [shape: f32[1024,128], index: 1, kind: input, shape index: {}]
  %s2 = inlined_call_operand.vmem [shape: f32[1,128], index: 2, kind: input, shape index: {}]
  %s3 = inlined_call_operand.hbm [shape: f32[128,128], index: 3, kind: input, shape index: {}]
  %s4 = inlined_call_operand.vmem [shape: f32[1,128], index: 4, kind: input, shape index: {}]
  %s5 = inlined_call_operand.vmem [shape: f32[1,128], index: 5, kind: input, shape index: {}]
  %s6 = inlined_call_operand.<no memory space> [shape: f32[1,1], index: 6, kind: input, shape index: {}]
  %s7 = inlined_call_operand.hbm [shape: f32[1,8], index: 7, kind: output, shape index: {}]
  %s8 = sld [smem:[#allocation0]]
  $region50: #{tpu_custom_call.1} parent=0
    _
  %s10 = ssub.s32 1, %s8
  %s11 = scalar_select 0, %s10, %s8
  %12 = sst [smem:[#allocation2]] %s6
  $region1: #{tpu_custom_call.1} parent=0
    #allocation3 [shape = 'u8[32768]{0}', space=vmem, size = 0x8000, scoped, tag = 'input window, operand 0, single buffered']
    #allocation4 [shape = 's32[1]{0}', space=sflag, size = 0x4, scoped, tag = 'scoped memory for tpu_custom_call.1']
    #allocation5 [shape = 's32[1]{0}', space=sflag, size = 0x4, scoped, tag = 'scoped memory for tpu_custom_call.1']
    #allocation6 [shape = 'u8[524288]{0}', space=vmem, size = 0x80000, scoped, tag = 'input window, operand 1, single buffered']
    #allocation7 [shape = 's32[1]{0}', space=sflag, size = 0x4, scoped, tag = 'scoped memory for tpu_custom_call.1']
    #allocation8 [shape = 'u8[65536]{0}', space=vmem, size = 0x10000, scoped, tag = 'input window, operand 3, single buffered']
    #allocation9 [shape = 'u8[512]{0}', space=vmem, size = 0x400, scoped, tag = 'output window, operand 0, single buffered']
    %13 = vsyncpa [#allocation4], 0
    %14 = vsyncpa [#allocation7], 0
    %15 = vsyncpa [#allocation5], 0
    // Predicated region
    $region2: #{tpu_custom_call.1} parent=1 // pred_check
      _
    $region3: #{tpu_custom_call.1} parent=1 // pred_check_branch
      %17 = sbr.rel (0) target = $region5
    $region4: #{tpu_custom_call.1} parent=1 // pred_region
      %s19 = ssub.s32 1024, 1024
      %20 = vsyncadd [#allocation4], %s19
      %s22 = sshll.u32 [#allocation3], 4
      %s23 = int_to_ptr.vmem [resolvable:$true] %s22
      %25 = dma.hbm_to_vmem [thread:$0]  %s0, 1024, %s23, [#allocation4]
    $region5: #{tpu_custom_call.1} parent=1 // pred_fallthru
      _
    // Predicated region
    $region6: #{tpu_custom_call.1} parent=1 // pred_check
      _
    $region7: #{tpu_custom_call.1} parent=1 // pred_check_branch
      %27 = sbr.rel (0) target = $region9
    $region8: #{tpu_custom_call.1} parent=1 // pred_region
      %s29 = ssub.s32 16384, 16384
      %30 = vsyncadd [#allocation7], %s29
      %s31 = sshll.u32 [#allocation6], 4
      %s32 = int_to_ptr.vmem [resolvable:$true] %s31
      %37 = dma.hbm_to_vmem [thread:$0]  %s1, 16384, %s32, [#allocation7], 128, 128, 8
    $region9: #{tpu_custom_call.1} parent=1 // pred_fallthru
      _
    // Predicated region
    $region10: #{tpu_custom_call.1} parent=1 // pred_check
      _
    $region11: #{tpu_custom_call.1} parent=1 // pred_check_branch
      %39 = sbr.rel (0) target = $region13
    $region12: #{tpu_custom_call.1} parent=1 // pred_region
      _
    $region13: #{tpu_custom_call.1} parent=1 // pred_fallthru
      _
    // Predicated region
    $region14: #{tpu_custom_call.1} parent=1 // pred_check
      _
    $region15: #{tpu_custom_call.1} parent=1 // pred_check_branch
      %41 = sbr.rel (0) target = $region17
    $region16: #{tpu_custom_call.1} parent=1 // pred_region
      %s43 = ssub.s32 2048, 2048
      %44 = vsyncadd [#allocation7], %s43
      %s45 = sshll.u32 [#allocation8], 4
      %s46 = int_to_ptr.vmem [resolvable:$true] %s45
      %51 = dma.hbm_to_vmem [thread:$0]  %s3, 2048, %s46, [#allocation7], 128, 128, 8
    $region17: #{tpu_custom_call.1} parent=1 // pred_fallthru
      _
    // Predicated region
    $region18: #{tpu_custom_call.1} parent=1 // pred_check
      _
    $region19: #{tpu_custom_call.1} parent=1 // pred_check_branch
      %53 = sbr.rel (0) target = $region21
    $region20: #{tpu_custom_call.1} parent=1 // pred_region
      _
    $region21: #{tpu_custom_call.1} parent=1 // pred_fallthru
      _
    // Predicated region
    $region22: #{tpu_custom_call.1} parent=1 // pred_check
      _
    $region23: #{tpu_custom_call.1} parent=1 // pred_check_branch
      %55 = sbr.rel (0) target = $region25
    $region24: #{tpu_custom_call.1} parent=1 // pred_region
      _
    $region25: #{tpu_custom_call.1} parent=1 // pred_fallthru
      _
    // Predicated region
    $region26: #{tpu_custom_call.1} parent=1 // pred_check
      _
    $region27: #{tpu_custom_call.1} parent=1 // pred_check_branch
      %57 = sbr.rel (0) target = $region29
    $region28: #{tpu_custom_call.1} parent=1 // pred_region
      _
    $region29: #{tpu_custom_call.1} parent=1 // pred_fallthru
      _
    // Predicated region
    $region30: #{tpu_custom_call.1} parent=1 // pred_check
      _
    $region31: #{tpu_custom_call.1} parent=1 // pred_check_branch
      %59 = sbr.rel (0) target = $region33
    $region32: #{tpu_custom_call.1} parent=1 // pred_region
      %60 = dma.done [#allocation4], 1024
    $region33: #{tpu_custom_call.1} parent=1 // pred_fallthru
      _
    // Predicated region
    $region34: #{tpu_custom_call.1} parent=1 // pred_check
      _
    $region35: #{tpu_custom_call.1} parent=1 // pred_check_branch
      %62 = sbr.rel (0) target = $region37
    $region36: #{tpu_custom_call.1} parent=1 // pred_region
      %63 = dma.done [#allocation7], 16384
    $region37: #{tpu_custom_call.1} parent=1 // pred_fallthru
      _
    // Predicated region
    $region38: #{tpu_custom_call.1} parent=1 // pred_check
      _
    $region39: #{tpu_custom_call.1} parent=1 // pred_check_branch
      %65 = sbr.rel (0) target = $region41
    $region40: #{tpu_custom_call.1} parent=1 // pred_region
      %66 = dma.done [#allocation7], 2048
    $region41: #{tpu_custom_call.1} parent=1 // pred_fallthru
      _
    %v67 = vld [vmem:[#allocation3] sm:$0xff]
    %v68 = vld [vmem:[#allocation3 + $0x8] sm:$0xff]
    %v69 = vld [vmem:[#allocation3 + $0x10] sm:$0xff]
    %v70 = vld [vmem:[#allocation3 + $0x18] sm:$0xff]
    %v71 = vld [vmem:[#allocation3 + $0x20] sm:$0xff]
    %v72 = vld [vmem:[#allocation3 + $0x28] sm:$0xff]
    %v73 = vld [vmem:[#allocation3 + $0x30] sm:$0xff]
    %v74 = vld [vmem:[#allocation3 + $0x38] sm:$0xff]
    %v75 = vld [vmem:[#allocation6] sm:$0xff]
    %v76 = vld [vmem:[#allocation6 + $0x8] sm:$0xff]
    %v77 = vld [vmem:[#allocation6 + $0x10] sm:$0xff]
    %v78 = vld [vmem:[#allocation6 + $0x18] sm:$0xff]
    %v79 = vld [vmem:[#allocation6 + $0x20] sm:$0xff]
    %v80 = vld [vmem:[#allocation6 + $0x28] sm:$0xff]
    %v81 = vld [vmem:[#allocation6 + $0x30] sm:$0xff]
    %v82 = vld [vmem:[#allocation6 + $0x38] sm:$0xff]
    %v83 = vld [vmem:[#allocation6 + $0x40] sm:$0xff]
    %v84 = vld [vmem:[#allocation6 + $0x48] sm:$0xff]
    %v85 = vld [vmem:[#allocation6 + $0x50] sm:$0xff]
    %v86 = vld [vmem:[#allocation6 + $0x58] sm:$0xff]
    %v87 = vld [vmem:[#allocation6 + $0x60] sm:$0xff]
    %v88 = vld [vmem:[#allocation6 + $0x68] sm:$0xff]
    %v89 = vld [vmem:[#allocation6 + $0x70] sm:$0xff]
    %v90 = vld [vmem:[#allocation6 + $0x78] sm:$0xff]
    %v91 = vld [vmem:[#allocation6 + $0x80] sm:$0xff]
    %v92 = vld [vmem:[#allocation6 + $0x88] sm:$0xff]
    %v93 = vld [vmem:[#allocation6 + $0x90] sm:$0xff]
    %v94 = vld [vmem:[#allocation6 + $0x98] sm:$0xff]
    %v95 = vld [vmem:[#allocation6 + $0xa0] sm:$0xff]
    %v96 = vld [vmem:[#allocation6 + $0xa8] sm:$0xff]
    %v97 = vld [vmem:[#allocation6 + $0xb0] sm:$0xff]
    %v98 = vld [vmem:[#allocation6 + $0xb8] sm:$0xff]
    %v99 = vld [vmem:[#allocation6 + $0xc0] sm:$0xff]
    %v100 = vld [vmem:[#allocation6 + $0xc8] sm:$0xff]
    %v101 = vld [vmem:[#allocation6 + $0xd0] sm:$0xff]
    %v102 = vld [vmem:[#allocation6 + $0xd8] sm:$0xff]
    %v103 = vld [vmem:[#allocation6 + $0xe0] sm:$0xff]
    %v104 = vld [vmem:[#allocation6 + $0xe8] sm:$0xff]
    %v105 = vld [vmem:[#allocation6 + $0xf0] sm:$0xff]
    %v106 = vld [vmem:[#allocation6 + $0xf8] sm:$0xff]
    %v107 = vld [vmem:[#allocation6 + $0x100] sm:$0xff]
    %v108 = vld [vmem:[#allocation6 + $0x108] sm:$0xff]
    %v109 = vld [vmem:[#allocation6 + $0x110] sm:$0xff]
    %v110 = vld [vmem:[#allocation6 + $0x118] sm:$0xff]
    %v111 = vld [vmem:[#allocation6 + $0x120] sm:$0xff]
    %v112 = vld [vmem:[#allocation6 + $0x128] sm:$0xff]
    %v113 = vld [vmem:[#allocation6 + $0x130] sm:$0xff]
    %v114 = vld [vmem:[#allocation6 + $0x138] sm:$0xff]
    %v115 = vld [vmem:[#allocation6 + $0x140] sm:$0xff]
    %v116 = vld [vmem:[#allocation6 + $0x148] sm:$0xff]
    %v117 = vld [vmem:[#allocation6 + $0x150] sm:$0xff]
    %v118 = vld [vmem:[#allocation6 + $0x158] sm:$0xff]
    %v119 = vld [vmem:[#allocation6 + $0x160] sm:$0xff]
    %v120 = vld [vmem:[#allocation6 + $0x168] sm:$0xff]
    %v121 = vld [vmem:[#allocation6 + $0x170] sm:$0xff]
    %v122 = vld [vmem:[#allocation6 + $0x178] sm:$0xff]
    %v123 = vld [vmem:[#allocation6 + $0x180] sm:$0xff]
    %v124 = vld [vmem:[#allocation6 + $0x188] sm:$0xff]
    %v125 = vld [vmem:[#allocation6 + $0x190] sm:$0xff]
    %v126 = vld [vmem:[#allocation6 + $0x198] sm:$0xff]
    %v127 = vld [vmem:[#allocation6 + $0x1a0] sm:$0xff]
    %v128 = vld [vmem:[#allocation6 + $0x1a8] sm:$0xff]
    %v129 = vld [vmem:[#allocation6 + $0x1b0] sm:$0xff]
    %v130 = vld [vmem:[#allocation6 + $0x1b8] sm:$0xff]
    %v131 = vld [vmem:[#allocation6 + $0x1c0] sm:$0xff]
    %v132 = vld [vmem:[#allocation6 + $0x1c8] sm:$0xff]
    %v133 = vld [vmem:[#allocation6 + $0x1d0] sm:$0xff]
    %v134 = vld [vmem:[#allocation6 + $0x1d8] sm:$0xff]
    %v135 = vld [vmem:[#allocation6 + $0x1e0] sm:$0xff]
    %v136 = vld [vmem:[#allocation6 + $0x1e8] sm:$0xff]
    %v137 = vld [vmem:[#allocation6 + $0x1f0] sm:$0xff]
    %v138 = vld [vmem:[#allocation6 + $0x1f8] sm:$0xff]
    %v139 = vld [vmem:[#allocation6 + $0x200] sm:$0xff]
    %v140 = vld [vmem:[#allocation6 + $0x208] sm:$0xff]
    %v141 = vld [vmem:[#allocation6 + $0x210] sm:$0xff]
    %v142 = vld [vmem:[#allocation6 + $0x218] sm:$0xff]
    %v143 = vld [vmem:[#allocation6 + $0x220] sm:$0xff]
    %v144 = vld [vmem:[#allocation6 + $0x228] sm:$0xff]
    %v145 = vld [vmem:[#allocation6 + $0x230] sm:$0xff]
    %v146 = vld [vmem:[#allocation6 + $0x238] sm:$0xff]
    %v147 = vld [vmem:[#allocation6 + $0x240] sm:$0xff]
    %v148 = vld [vmem:[#allocation6 + $0x248] sm:$0xff]
    %v149 = vld [vmem:[#allocation6 + $0x250] sm:$0xff]
    %v150 = vld [vmem:[#allocation6 + $0x258] sm:$0xff]
    %v151 = vld [vmem:[#allocation6 + $0x260] sm:$0xff]
    %v152 = vld [vmem:[#allocation6 + $0x268] sm:$0xff]
    %v153 = vld [vmem:[#allocation6 + $0x270] sm:$0xff]
    %v154 = vld [vmem:[#allocation6 + $0x278] sm:$0xff]
    %v155 = vld [vmem:[#allocation6 + $0x280] sm:$0xff]
    %v156 = vld [vmem:[#allocation6 + $0x288] sm:$0xff]
    %v157 = vld [vmem:[#allocation6 + $0x290] sm:$0xff]
    %v158 = vld [vmem:[#allocation6 + $0x298] sm:$0xff]
    %v159 = vld [vmem:[#allocation6 + $0x2a0] sm:$0xff]
    %v160 = vld [vmem:[#allocation6 + $0x2a8] sm:$0xff]
    %v161 = vld [vmem:[#allocation6 + $0x2b0] sm:$0xff]
    %v162 = vld [vmem:[#allocation6 + $0x2b8] sm:$0xff]
    %v163 = vld [vmem:[#allocation6 + $0x2c0] sm:$0xff]
    %v164 = vld [vmem:[#allocation6 + $0x2c8] sm:$0xff]
    %v165 = vld [vmem:[#allocation6 + $0x2d0] sm:$0xff]
    %v166 = vld [vmem:[#allocation6 + $0x2d8] sm:$0xff]
    %v167 = vld [vmem:[#allocation6 + $0x2e0] sm:$0xff]
    %v168 = vld [vmem:[#allocation6 + $0x2e8] sm:$0xff]
    %v169 = vld [vmem:[#allocation6 + $0x2f0] sm:$0xff]
    %v170 = vld [vmem:[#allocation6 + $0x2f8] sm:$0xff]
    %v171 = vld [vmem:[#allocation6 + $0x300] sm:$0xff]
    %v172 = vld [vmem:[#allocation6 + $0x308] sm:$0xff]
    %v173 = vld [vmem:[#allocation6 + $0x310] sm:$0xff]
    %v174 = vld [vmem:[#allocation6 + $0x318] sm:$0xff]
    %v175 = vld [vmem:[#allocation6 + $0x320] sm:$0xff]
    %v176 = vld [vmem:[#allocation6 + $0x328] sm:$0xff]
    %v177 = vld [vmem:[#allocation6 + $0x330] sm:$0xff]
    %v178 = vld [vmem:[#allocation6 + $0x338] sm:$0xff]
    %v179 = vld [vmem:[#allocation6 + $0x340] sm:$0xff]
    %v180 = vld [vmem:[#allocation6 + $0x348] sm:$0xff]
    %v181 = vld [vmem:[#allocation6 + $0x350] sm:$0xff]
    %v182 = vld [vmem:[#allocation6 + $0x358] sm:$0xff]
    %v183 = vld [vmem:[#allocation6 + $0x360] sm:$0xff]
    %v184 = vld [vmem:[#allocation6 + $0x368] sm:$0xff]
    %v185 = vld [vmem:[#allocation6 + $0x370] sm:$0xff]
    %v186 = vld [vmem:[#allocation6 + $0x378] sm:$0xff]
    %v187 = vld [vmem:[#allocation6 + $0x380] sm:$0xff]
    %v188 = vld [vmem:[#allocation6 + $0x388] sm:$0xff]
    %v189 = vld [vmem:[#allocation6 + $0x390] sm:$0xff]
    %v190 = vld [vmem:[#allocation6 + $0x398] sm:$0xff]
    %v191 = vld [vmem:[#allocation6 + $0x3a0] sm:$0xff]
    %v192 = vld [vmem:[#allocation6 + $0x3a8] sm:$0xff]
    %v193 = vld [vmem:[#allocation6 + $0x3b0] sm:$0xff]
    %v194 = vld [vmem:[#allocation6 + $0x3b8] sm:$0xff]
    %v195 = vld [vmem:[#allocation6 + $0x3c0] sm:$0xff]
    %v196 = vld [vmem:[#allocation6 + $0x3c8] sm:$0xff]
    %v197 = vld [vmem:[#allocation6 + $0x3d0] sm:$0xff]
    %v198 = vld [vmem:[#allocation6 + $0x3d8] sm:$0xff]
    %v199 = vld [vmem:[#allocation6 + $0x3e0] sm:$0xff]
    %v200 = vld [vmem:[#allocation6 + $0x3e8] sm:$0xff]
    %v201 = vld [vmem:[#allocation6 + $0x3f0] sm:$0xff]
    %v202 = vld [vmem:[#allocation6 + $0x3f8] sm:$0xff]
    %v203 = vld [vmem:[%s2] sm:$0x1]
    %v205 = vlaneseq
    %v206 = vshrl.u32 %v205, 7
    %v207 = vsub.s32 0, %v206
    %v208 = vrot.slane %v203, %v207
    %210 = vmatprep.subr.mxu0 0.0
    %211 = vmatpush1.msra.mxu0 %v75
    %212 = vmatprep.subr.mxu0 0.0
    %213 = vmatpush1.msra.mxu0 %v76
    %214 = vmatprep.subr.mxu0 0.0
    %215 = vmatpush1.msra.mxu0 %v77
    %216 = vmatprep.subr.mxu0 0.0
    %217 = vmatpush1.msra.mxu0 %v78
    %218 = vmatprep.subr.mxu0 0.0
    %219 = vmatpush1.msra.mxu0 %v79
    %220 = vmatprep.subr.mxu0 0.0
    %221 = vmatpush1.msra.mxu0 %v80
    %222 = vmatprep.subr.mxu0 0.0
    %223 = vmatpush1.msra.mxu0 %v81
    %224 = vmatprep.subr.mxu0 0.0
    %225 = vmatpush1.msra.mxu0 %v82
    %226 = vmatprep.subr.mxu0 0.0
    %227 = vmatpush1.msra.mxu0 %v83
    %228 = vmatprep.subr.mxu0 0.0
    %229 = vmatpush1.msra.mxu0 %v84
    %230 = vmatprep.subr.mxu0 0.0
    %231 = vmatpush1.msra.mxu0 %v85
    %232 = vmatprep.subr.mxu0 0.0
    %233 = vmatpush1.msra.mxu0 %v86
    %234 = vmatprep.subr.mxu0 0.0
    %235 = vmatpush1.msra.mxu0 %v87
    %236 = vmatprep.subr.mxu0 0.0
    %237 = vmatpush1.msra.mxu0 %v88
    %238 = vmatprep.subr.mxu0 0.0
    %239 = vmatpush1.msra.mxu0 %v89
    %240 = vmatprep.subr.mxu0 0.0
    %241 = vmatpush1.msra.mxu0 %v90
    %242 = vmatprep.subr.mxu0 0.0
    %243 = vmatpush1.msra.mxu0 %v91
    %244 = vmatprep.subr.mxu0 0.0
    %245 = vmatpush1.msra.mxu0 %v92
    %246 = vmatprep.subr.mxu0 0.0
    %247 = vmatpush1.msra.mxu0 %v93
    %248 = vmatprep.subr.mxu0 0.0
    %249 = vmatpush1.msra.mxu0 %v94
    %250 = vmatprep.subr.mxu0 0.0
    %251 = vmatpush1.msra.mxu0 %v95
    %252 = vmatprep.subr.mxu0 0.0
    %253 = vmatpush1.msra.mxu0 %v96
    %254 = vmatprep.subr.mxu0 0.0
    %255 = vmatpush1.msra.mxu0 %v97
    %256 = vmatprep.subr.mxu0 0.0
    %257 = vmatpush1.msra.mxu0 %v98
    %258 = vmatprep.subr.mxu0 0.0
    %259 = vmatpush1.msra.mxu0 %v99
    %260 = vmatprep.subr.mxu0 0.0
    %261 = vmatpush1.msra.mxu0 %v100
    %262 = vmatprep.subr.mxu0 0.0
    %263 = vmatpush1.msra.mxu0 %v101
    %264 = vmatprep.subr.mxu0 0.0
    %265 = vmatpush1.msra.mxu0 %v102
    %266 = vmatprep.subr.mxu0 0.0
    %267 = vmatpush1.msra.mxu0 %v103
    %268 = vmatprep.subr.mxu0 0.0
    %269 = vmatpush1.msra.mxu0 %v104
    %270 = vmatprep.subr.mxu0 0.0
    %271 = vmatpush1.msra.mxu0 %v105
    %272 = vmatprep.subr.mxu0 0.0
    %273 = vmatpush1.msra.mxu0 %v106
    %274 = vmatprep.mubr.f32.mxu0 %v68
    %275 = vmatmul.mubr.f32.gmra.mrb[0].mxu0 %v67
    %v276 = vpop.f32.mrb[0].mxu0
    %v277 = vadd.f32 %v208, %v276
    %v278 = vpop.f32.mrb[0].mxu0
    %279 = vdwg.mxu0
    %280 = vmatprep.subr.mxu0 0.0
    %281 = vmatpush1.msra.mxu0 %v107
    %282 = vmatprep.subr.mxu0 0.0
    %283 = vmatpush1.msra.mxu0 %v108
    %284 = vmatprep.subr.mxu0 0.0
    %285 = vmatpush1.msra.mxu0 %v109
    %286 = vmatprep.subr.mxu0 0.0
    %287 = vmatpush1.msra.mxu0 %v110
    %288 = vmatprep.subr.mxu0 0.0
    %289 = vmatpush1.msra.mxu0 %v111
    %290 = vmatprep.subr.mxu0 0.0
    %291 = vmatpush1.msra.mxu0 %v112
    %292 = vmatprep.subr.mxu0 0.0
    %293 = vmatpush1.msra.mxu0 %v113
    %294 = vmatprep.subr.mxu0 0.0
    %295 = vmatpush1.msra.mxu0 %v114
    %296 = vmatprep.subr.mxu0 0.0
    %297 = vmatpush1.msra.mxu0 %v115
    %298 = vmatprep.subr.mxu0 0.0
    %299 = vmatpush1.msra.mxu0 %v116
    %300 = vmatprep.subr.mxu0 0.0
    %301 = vmatpush1.msra.mxu0 %v117
    %302 = vmatprep.subr.mxu0 0.0
    %303 = vmatpush1.msra.mxu0 %v118
    %304 = vmatprep.subr.mxu0 0.0
    %305 = vmatpush1.msra.mxu0 %v119
    %306 = vmatprep.subr.mxu0 0.0
    %307 = vmatpush1.msra.mxu0 %v120
    %308 = vmatprep.subr.mxu0 0.0
    %309 = vmatpush1.msra.mxu0 %v121
    %310 = vmatprep.subr.mxu0 0.0
    %311 = vmatpush1.msra.mxu0 %v122
    %312 = vmatprep.subr.mxu0 0.0
    %313 = vmatpush1.msra.mxu0 %v123
    %314 = vmatprep.subr.mxu0 0.0
    %315 = vmatpush1.msra.mxu0 %v124
    %316 = vmatprep.subr.mxu0 0.0
    %317 = vmatpush1.msra.mxu0 %v125
    %318 = vmatprep.subr.mxu0 0.0
    %319 = vmatpush1.msra.mxu0 %v126
    %320 = vmatprep.subr.mxu0 0.0
    %321 = vmatpush1.msra.mxu0 %v127
    %322 = vmatprep.subr.mxu0 0.0
    %323 = vmatpush1.msra.mxu0 %v128
    %324 = vmatprep.subr.mxu0 0.0
    %325 = vmatpush1.msra.mxu0 %v129
    %326 = vmatprep.subr.mxu0 0.0
    %327 = vmatpush1.msra.mxu0 %v130
    %328 = vmatprep.subr.mxu0 0.0
    %329 = vmatpush1.msra.mxu0 %v131
    %330 = vmatprep.subr.mxu0 0.0
    %331 = vmatpush1.msra.mxu0 %v132
    %332 = vmatprep.subr.mxu0 0.0
    %333 = vmatpush1.msra.mxu0 %v133
    %334 = vmatprep.subr.mxu0 0.0
    %335 = vmatpush1.msra.mxu0 %v134
    %336 = vmatprep.subr.mxu0 0.0
    %337 = vmatpush1.msra.mxu0 %v135
    %338 = vmatprep.subr.mxu0 0.0
    %339 = vmatpush1.msra.mxu0 %v136
    %340 = vmatprep.subr.mxu0 0.0
    %341 = vmatpush1.msra.mxu0 %v137
    %342 = vmatprep.subr.mxu0 0.0
    %343 = vmatpush1.msra.mxu0 %v138
    %344 = vmatprep.mubr.f32.mxu0 %v70
    %345 = vmatmul.mubr.f32.gmra.mrb[0].mxu0 %v69
    %v346 = vpop.f32.mrb[0].mxu0
    %v347 = vadd.f32 %v277, %v346
    %v348 = vpop.f32.mrb[0].mxu0
    %349 = vdwg.mxu0
    %350 = vmatprep.subr.mxu0 0.0
    %351 = vmatpush1.msra.mxu0 %v139
    %352 = vmatprep.subr.mxu0 0.0
    %353 = vmatpush1.msra.mxu0 %v140
    %354 = vmatprep.subr.mxu0 0.0
    %355 = vmatpush1.msra.mxu0 %v141
    %356 = vmatprep.subr.mxu0 0.0
    %357 = vmatpush1.msra.mxu0 %v142
    %358 = vmatprep.subr.mxu0 0.0
    %359 = vmatpush1.msra.mxu0 %v143
    %360 = vmatprep.subr.mxu0 0.0
    %361 = vmatpush1.msra.mxu0 %v144
    %362 = vmatprep.subr.mxu0 0.0
    %363 = vmatpush1.msra.mxu0 %v145
    %364 = vmatprep.subr.mxu0 0.0
    %365 = vmatpush1.msra.mxu0 %v146
    %366 = vmatprep.subr.mxu0 0.0
    %367 = vmatpush1.msra.mxu0 %v147
    %368 = vmatprep.subr.mxu0 0.0
    %369 = vmatpush1.msra.mxu0 %v148
    %370 = vmatprep.subr.mxu0 0.0
    %371 = vmatpush1.msra.mxu0 %v149
    %372 = vmatprep.subr.mxu0 0.0
    %373 = vmatpush1.msra.mxu0 %v150
    %374 = vmatprep.subr.mxu0 0.0
    %375 = vmatpush1.msra.mxu0 %v151
    %376 = vmatprep.subr.mxu0 0.0
    %377 = vmatpush1.msra.mxu0 %v152
    %378 = vmatprep.subr.mxu0 0.0
    %379 = vmatpush1.msra.mxu0 %v153
    %380 = vmatprep.subr.mxu0 0.0
    %381 = vmatpush1.msra.mxu0 %v154
    %382 = vmatprep.subr.mxu0 0.0
    %383 = vmatpush1.msra.mxu0 %v155
    %384 = vmatprep.subr.mxu0 0.0
    %385 = vmatpush1.msra.mxu0 %v156
    %386 = vmatprep.subr.mxu0 0.0
    %387 = vmatpush1.msra.mxu0 %v157
    %388 = vmatprep.subr.mxu0 0.0
    %389 = vmatpush1.msra.mxu0 %v158
    %390 = vmatprep.subr.mxu0 0.0
    %391 = vmatpush1.msra.mxu0 %v159
    %392 = vmatprep.subr.mxu0 0.0
    %393 = vmatpush1.msra.mxu0 %v160
    %394 = vmatprep.subr.mxu0 0.0
    %395 = vmatpush1.msra.mxu0 %v161
    %396 = vmatprep.subr.mxu0 0.0
    %397 = vmatpush1.msra.mxu0 %v162
    %398 = vmatprep.subr.mxu0 0.0
    %399 = vmatpush1.msra.mxu0 %v163
    %400 = vmatprep.subr.mxu0 0.0
    %401 = vmatpush1.msra.mxu0 %v164
    %402 = vmatprep.subr.mxu0 0.0
    %403 = vmatpush1.msra.mxu0 %v165
    %404 = vmatprep.subr.mxu0 0.0
    %405 = vmatpush1.msra.mxu0 %v166
    %406 = vmatprep.subr.mxu0 0.0
    %407 = vmatpush1.msra.mxu0 %v167
    %408 = vmatprep.subr.mxu0 0.0
    %409 = vmatpush1.msra.mxu0 %v168
    %410 = vmatprep.subr.mxu0 0.0
    %411 = vmatpush1.msra.mxu0 %v169
    %412 = vmatprep.subr.mxu0 0.0
    %413 = vmatpush1.msra.mxu0 %v170
    %414 = vmatprep.mubr.f32.mxu0 %v72
    %415 = vmatmul.mubr.f32.gmra.mrb[0].mxu0 %v71
    %v416 = vpop.f32.mrb[0].mxu0
    %v417 = vadd.f32 %v347, %v416
    %v418 = vpop.f32.mrb[0].mxu0
    %419 = vdwg.mxu0
    %420 = vmatprep.subr.mxu0 0.0
    %421 = vmatpush1.msra.mxu0 %v171
    %422 = vmatprep.subr.mxu0 0.0
    %423 = vmatpush1.msra.mxu0 %v172
    %424 = vmatprep.subr.mxu0 0.0
    %425 = vmatpush1.msra.mxu0 %v173
    %426 = vmatprep.subr.mxu0 0.0
    %427 = vmatpush1.msra.mxu0 %v174
    %428 = vmatprep.subr.mxu0 0.0
    %429 = vmatpush1.msra.mxu0 %v175
    %430 = vmatprep.subr.mxu0 0.0
    %431 = vmatpush1.msra.mxu0 %v176
    %432 = vmatprep.subr.mxu0 0.0
    %433 = vmatpush1.msra.mxu0 %v177
    %434 = vmatprep.subr.mxu0 0.0
    %435 = vmatpush1.msra.mxu0 %v178
    %436 = vmatprep.subr.mxu0 0.0
    %437 = vmatpush1.msra.mxu0 %v179
    %438 = vmatprep.subr.mxu0 0.0
    %439 = vmatpush1.msra.mxu0 %v180
    %440 = vmatprep.subr.mxu0 0.0
    %441 = vmatpush1.msra.mxu0 %v181
    %442 = vmatprep.subr.mxu0 0.0
    %443 = vmatpush1.msra.mxu0 %v182
    %444 = vmatprep.subr.mxu0 0.0
    %445 = vmatpush1.msra.mxu0 %v183
    %446 = vmatprep.subr.mxu0 0.0
    %447 = vmatpush1.msra.mxu0 %v184
    %448 = vmatprep.subr.mxu0 0.0
    %449 = vmatpush1.msra.mxu0 %v185
    %450 = vmatprep.subr.mxu0 0.0
    %451 = vmatpush1.msra.mxu0 %v186
    %452 = vmatprep.subr.mxu0 0.0
    %453 = vmatpush1.msra.mxu0 %v187
    %454 = vmatprep.subr.mxu0 0.0
    %455 = vmatpush1.msra.mxu0 %v188
    %456 = vmatprep.subr.mxu0 0.0
    %457 = vmatpush1.msra.mxu0 %v189
    %458 = vmatprep.subr.mxu0 0.0
    %459 = vmatpush1.msra.mxu0 %v190
    %460 = vmatprep.subr.mxu0 0.0
    %461 = vmatpush1.msra.mxu0 %v191
    %462 = vmatprep.subr.mxu0 0.0
    %463 = vmatpush1.msra.mxu0 %v192
    %464 = vmatprep.subr.mxu0 0.0
    %465 = vmatpush1.msra.mxu0 %v193
    %466 = vmatprep.subr.mxu0 0.0
    %467 = vmatpush1.msra.mxu0 %v194
    %468 = vmatprep.subr.mxu0 0.0
    %469 = vmatpush1.msra.mxu0 %v195
    %470 = vmatprep.subr.mxu0 0.0
    %471 = vmatpush1.msra.mxu0 %v196
    %472 = vmatprep.subr.mxu0 0.0
    %473 = vmatpush1.msra.mxu0 %v197
    %474 = vmatprep.subr.mxu0 0.0
    %475 = vmatpush1.msra.mxu0 %v198
    %476 = vmatprep.subr.mxu0 0.0
    %477 = vmatpush1.msra.mxu0 %v199
    %478 = vmatprep.subr.mxu0 0.0
    %479 = vmatpush1.msra.mxu0 %v200
    %480 = vmatprep.subr.mxu0 0.0
    %481 = vmatpush1.msra.mxu0 %v201
    %482 = vmatprep.subr.mxu0 0.0
    %483 = vmatpush1.msra.mxu0 %v202
    %484 = vmatprep.mubr.f32.mxu0 %v74
    %485 = vmatmul.mubr.f32.gmra.mrb[0].mxu0 %v73
    %v486 = vpop.f32.mrb[0].mxu0
    %v487 = vadd.f32 %v417, %v486
    %v488 = vpop.f32.mrb[0].mxu0
    %489 = vdwg.mxu0
    %v490 = vmax.f32 %v487, 0.0
    %v491 = vld [vmem:[#allocation8] sm:$0xff]
    %v492 = vld [vmem:[#allocation8 + $0x8] sm:$0xff]
    %v493 = vld [vmem:[#allocation8 + $0x10] sm:$0xff]
    %v494 = vld [vmem:[#allocation8 + $0x18] sm:$0xff]
    %v495 = vld [vmem:[#allocation8 + $0x20] sm:$0xff]
    %v496 = vld [vmem:[#allocation8 + $0x28] sm:$0xff]
    %v497 = vld [vmem:[#allocation8 + $0x30] sm:$0xff]
    %v498 = vld [vmem:[#allocation8 + $0x38] sm:$0xff]
    %v499 = vld [vmem:[#allocation8 + $0x40] sm:$0xff]
    %v500 = vld [vmem:[#allocation8 + $0x48] sm:$0xff]
    %v501 = vld [vmem:[#allocation8 + $0x50] sm:$0xff]
    %v502 = vld [vmem:[#allocation8 + $0x58] sm:$0xff]
    %v503 = vld [vmem:[#allocation8 + $0x60] sm:$0xff]
    %v504 = vld [vmem:[#allocation8 + $0x68] sm:$0xff]
    %v505 = vld [vmem:[#allocation8 + $0x70] sm:$0xff]
    %v506 = vld [vmem:[#allocation8 + $0x78] sm:$0xff]
    %v507 = vld [vmem:[%s4] sm:$0x1]
    %v509 = vlaneseq
    %v510 = vshrl.u32 %v509, 7
    %v511 = vsub.s32 0, %v510
    %v512 = vrot.slane %v507, %v511
    %514 = vmatprep.subr.mxu0 0.0
    %515 = vmatpush1.msra.mxu0 %v491
    %516 = vmatprep.subr.mxu0 0.0
    %517 = vmatpush1.msra.mxu0 %v492
    %518 = vmatprep.subr.mxu0 0.0
    %519 = vmatpush1.msra.mxu0 %v493
    %520 = vmatprep.subr.mxu0 0.0
    %521 = vmatpush1.msra.mxu0 %v494
    %522 = vmatprep.subr.mxu0 0.0
    %523 = vmatpush1.msra.mxu0 %v495
    %524 = vmatprep.subr.mxu0 0.0
    %525 = vmatpush1.msra.mxu0 %v496
    %526 = vmatprep.subr.mxu0 0.0
    %527 = vmatpush1.msra.mxu0 %v497
    %528 = vmatprep.subr.mxu0 0.0
    %529 = vmatpush1.msra.mxu0 %v498
    %530 = vmatprep.subr.mxu0 0.0
    %531 = vmatpush1.msra.mxu0 %v499
    %532 = vmatprep.subr.mxu0 0.0
    %533 = vmatpush1.msra.mxu0 %v500
    %534 = vmatprep.subr.mxu0 0.0
    %535 = vmatpush1.msra.mxu0 %v501
    %536 = vmatprep.subr.mxu0 0.0
    %537 = vmatpush1.msra.mxu0 %v502
    %538 = vmatprep.subr.mxu0 0.0
    %539 = vmatpush1.msra.mxu0 %v503
    %540 = vmatprep.subr.mxu0 0.0
    %541 = vmatpush1.msra.mxu0 %v504
    %542 = vmatprep.subr.mxu0 0.0
    %543 = vmatpush1.msra.mxu0 %v505
    %544 = vmatprep.subr.mxu0 0.0
    %545 = vmatpush1.msra.mxu0 %v506
    %546 = vmatprep.subr.mxu0 0.0
    %547 = vmatpush1.msra.mxu0 0.0
    %548 = vmatprep.subr.mxu0 0.0
    %549 = vmatpush1.msra.mxu0 0.0
    %550 = vmatprep.subr.mxu0 0.0
    %551 = vmatpush1.msra.mxu0 0.0
    %552 = vmatprep.subr.mxu0 0.0
    %553 = vmatpush1.msra.mxu0 0.0
    %554 = vmatprep.subr.mxu0 0.0
    %555 = vmatpush1.msra.mxu0 0.0
    %556 = vmatprep.subr.mxu0 0.0
    %557 = vmatpush1.msra.mxu0 0.0
    %558 = vmatprep.subr.mxu0 0.0
    %559 = vmatpush1.msra.mxu0 0.0
    %560 = vmatprep.subr.mxu0 0.0
    %561 = vmatpush1.msra.mxu0 0.0
    %562 = vmatprep.subr.mxu0 0.0
    %563 = vmatpush1.msra.mxu0 0.0
    %564 = vmatprep.subr.mxu0 0.0
    %565 = vmatpush1.msra.mxu0 0.0
    %566 = vmatprep.subr.mxu0 0.0
    %567 = vmatpush1.msra.mxu0 0.0
    %568 = vmatprep.subr.mxu0 0.0
    %569 = vmatpush1.msra.mxu0 0.0
    %570 = vmatprep.subr.mxu0 0.0
    %571 = vmatpush1.msra.mxu0 0.0
    %572 = vmatprep.subr.mxu0 0.0
    %573 = vmatpush1.msra.mxu0 0.0
    %574 = vmatprep.subr.mxu0 0.0
    %575 = vmatpush1.msra.mxu0 0.0
    %576 = vmatprep.subr.mxu0 0.0
    %577 = vmatpush1.msra.mxu0 0.0
    %578 = vmatprep.mubr.f32.mxu0 0.0
    %579 = vmatmul.mubr.f32.gmra.mrb[0].mxu0 %v490
    %v580 = vpop.f32.mrb[0].mxu0
    %v581 = vadd.f32 %v512, %v580
    %v582 = vpop.f32.mrb[0].mxu0
    %583 = vdwg.mxu0
    %v584 = vmax.f32 %v581, 0.0
    %v585 = vld [vmem:[%s5] sm:$0x1]
    %s586 = sld [smem:[#allocation2]]
    %v587 = vstv %s586
    %588 = vmatprep.subr.mxu0 0.0
    %589 = vmatpush1.xpose.msra.mxu0 %v584
    %590 = vmatprep.subr.mxu0 0.0
    %591 = vmatpush1.xpose.msra.mxu0 0.0
    %592 = vmatprep.subr.mxu0 0.0
    %593 = vmatpush1.xpose.msra.mxu0 0.0
    %594 = vmatprep.subr.mxu0 0.0
    %595 = vmatpush1.xpose.msra.mxu0 0.0
    %596 = vmatprep.subr.mxu0 0.0
    %597 = vmatpush1.xpose.msra.mxu0 0.0
    %598 = vmatprep.subr.mxu0 0.0
    %599 = vmatpush1.xpose.msra.mxu0 0.0
    %600 = vmatprep.subr.mxu0 0.0
    %601 = vmatpush1.xpose.msra.mxu0 0.0
    %602 = vmatprep.subr.mxu0 0.0
    %603 = vmatpush1.xpose.msra.mxu0 0.0
    %604 = vmatprep.subr.mxu0 0.0
    %605 = vmatpush1.xpose.msra.mxu0 0.0
    %606 = vmatprep.subr.mxu0 0.0
    %607 = vmatpush1.xpose.msra.mxu0 0.0
    %608 = vmatprep.subr.mxu0 0.0
    %609 = vmatpush1.xpose.msra.mxu0 0.0
    %610 = vmatprep.subr.mxu0 0.0
    %611 = vmatpush1.xpose.msra.mxu0 0.0
    %612 = vmatprep.subr.mxu0 0.0
    %613 = vmatpush1.xpose.msra.mxu0 0.0
    %614 = vmatprep.subr.mxu0 0.0
    %615 = vmatpush1.xpose.msra.mxu0 0.0
    %616 = vmatprep.subr.mxu0 0.0
    %617 = vmatpush1.xpose.msra.mxu0 0.0
    %618 = vmatprep.subr.mxu0 0.0
    %619 = vmatpush1.xpose.msra.mxu0 0.0
    %620 = vmatprep.subr.mxu0 0.0
    %621 = vmatpush1.xpose.msra.mxu0 0.0
    %622 = vmatprep.subr.mxu0 0.0
    %623 = vmatpush1.xpose.msra.mxu0 0.0
    %624 = vmatprep.subr.mxu0 0.0
    %625 = vmatpush1.xpose.msra.mxu0 0.0
    %626 = vmatprep.subr.mxu0 0.0
    %627 = vmatpush1.xpose.msra.mxu0 0.0
    %628 = vmatprep.subr.mxu0 0.0
    %629 = vmatpush1.xpose.msra.mxu0 0.0
    %630 = vmatprep.subr.mxu0 0.0
    %631 = vmatpush1.xpose.msra.mxu0 0.0
    %632 = vmatprep.subr.mxu0 0.0
    %633 = vmatpush1.xpose.msra.mxu0 0.0
    %634 = vmatprep.subr.mxu0 0.0
    %635 = vmatpush1.xpose.msra.mxu0 0.0
    %636 = vmatprep.subr.mxu0 0.0
    %637 = vmatpush1.xpose.msra.mxu0 0.0
    %638 = vmatprep.subr.mxu0 0.0
    %639 = vmatpush1.xpose.msra.mxu0 0.0
    %640 = vmatprep.subr.mxu0 0.0
    %641 = vmatpush1.xpose.msra.mxu0 0.0
    %642 = vmatprep.subr.mxu0 0.0
    %643 = vmatpush1.xpose.msra.mxu0 0.0
    %644 = vmatprep.subr.mxu0 0.0
    %645 = vmatpush1.xpose.msra.mxu0 0.0
    %646 = vmatprep.subr.mxu0 0.0
    %647 = vmatpush1.xpose.msra.mxu0 0.0
    %648 = vmatprep.subr.mxu0 0.0
    %649 = vmatpush1.xpose.msra.mxu0 0.0
    %650 = vmatprep.subr.mxu0 0.0
    %651 = vmatpush1.xpose.msra.mxu0 0.0
    %652 = vmatprep.mubr.f32.mxu0 0.0
    %653 = vmatmul.mubr.f32.gmra.mrb[0].mxu0 %v585
    %v654 = vpop.f32.mrb[0].mxu0
    %v655 = vadd.f32 %v587, %v654
    %v656 = vpop.f32.mrb[0].mxu0
    %657 = vdwg.mxu0
    %v658 = vsub.f32 0.0, %v655
    %v659 = vmul.f32 %v658, 1.442695
    %v660 = vpow.pop %v659
    %v661 = vadd.f32 %v660, 1.0
    %v662 = vrcp.pop %v661
    %v663 = vmul.f32 1.0, %v662
    %vm664 = vcmask 57344
    %665 = vst.msk [vmem:[#allocation9] sm:$0x1] %vm664, %v663
    // Predicated region
    $region42: #{tpu_custom_call.1} parent=1 // pred_check
      _
    $region43: #{tpu_custom_call.1} parent=1 // pred_check_branch
      %667 = sbr.rel (0) target = $region45
    $region44: #{tpu_custom_call.1} parent=1 // pred_region
      %s669 = ssub.s32 16, 16
      %670 = vsyncadd [#allocation5], %s669
      %s672 = sshll.u32 [#allocation9], 4
      %s673 = int_to_ptr.vmem [resolvable:$true] %s672
      %675 = dma.vmem_to_hbm [thread:$0]  %s673, 16, %s7, [#allocation5]
    $region45: #{tpu_custom_call.1} parent=1 // pred_fallthru
      _
    // Predicated region
    $region46: #{tpu_custom_call.1} parent=1 // pred_check
      _
    $region47: #{tpu_custom_call.1} parent=1 // pred_check_branch
      %677 = sbr.rel (0) target = $region49
    $region48: #{tpu_custom_call.1} parent=1 // pred_region
      %678 = dma.done [#allocation5], 16
    $region49: #{tpu_custom_call.1} parent=1 // pred_fallthru
      _
    %679 = vsyncpa [#allocation4], 1
    %680 = vsyncpa [#allocation7], 1
    %681 = vsyncpa [#allocation5], 1

</llo_original>
